<compile_context>
chip_gen: v5e
topology: v5e:2x2
jax: 0.10.0
libtpu: 0.0.40
codegen_flags: <defaults>
</compile_context>

<pallas_src>
import jax
import jax.numpy as jnp
from jax.experimental import pallas as pl
from jax.experimental.pallas import tpu as pltpu

# ------------------- small synthetic config -------------------
POOL_RES = 4            # POOLER_RESOLUTION
SPATIAL_SCALE = 0.25    # feature stride 4
IN_CHANNELS = 4
REP_SIZE = 32           # MLP_HEAD_DIM (feature_extractor.out_channels)
NUM_CLASSES = 8
BOX_DIM = 4 * NUM_CLASSES

# kernel-side (lane-aligned) dims
D_IN = IN_CHANNELS * POOL_RES * POOL_RES   # 64 (logical)
D_IN_PAD = 128                             # padded fc6 input width
REP_PAD = 128                              # padded hidden width
OUT_PAD = 128                              # padded fused cls+box width (8 + 32 -> 128)


# ------------------- Pallas kernel: fused MLP head + predictor -------------------
def _box_head_kernel(x_ref, w6_ref, b6_ref, w7_ref, b7_ref, wcb_ref, bcb_ref,
                     feat_ref, pred_ref):
    # x tile: [TILE_N, D_IN_PAD] f32; weights bf16, biases f32, accumulation f32.
    x = x_ref[...].astype(jnp.bfloat16)
    h6 = jnp.dot(x, w6_ref[...], preferred_element_type=jnp.float32) + b6_ref[...]
    h6 = jnp.maximum(h6, 0.0)                                          # fc6 + ReLU (f32)
    h7 = jnp.dot(h6.astype(jnp.bfloat16), w7_ref[...],
                 preferred_element_type=jnp.float32) + b7_ref[...]
    h7 = jnp.maximum(h7, 0.0)                                          # fc7 + ReLU (f32)
    feat_ref[...] = h7                                                 # box_logits (padded lanes are 0)
    # fused cls_score | bbox_pred : one lane-dense [TILE_N, 128] store
    pred_ref[...] = jnp.dot(h7.astype(jnp.bfloat16), wcb_ref[...],
                            preferred_element_type=jnp.float32) + bcb_ref[...]


def box_head_pallas(x_flat, kernel_params, tile_n=128):
    """x_flat: [N_roi, D_IN] float32. Returns (box_logits, class_logits, box_regression)."""
    n, d_in = x_flat.shape
    w6, b6, w7, b7, wcb, bcb = kernel_params

    # pad ROI dim to a tile multiple and feature dim to 128 lanes
    tile_n = max(8, min(tile_n, ((n + 7) // 8) * 8))
    n_pad = ((n + tile_n - 1) // tile_n) * tile_n
    x_p = jnp.zeros((n_pad, D_IN_PAD), jnp.float32).at[:n, :d_in].set(x_flat)

    grid = (n_pad // tile_n,)

    # weights/biases: constant index_map -> DMA'd once, resident across ROI tiles
    const2 = lambda i: (0, 0)
    in_specs = [
        pl.BlockSpec((tile_n, D_IN_PAD), lambda i: (i, 0)),   # x tile (streamed)
        pl.BlockSpec((D_IN_PAD, REP_PAD), const2),            # w6 (bf16, resident)
        pl.BlockSpec((1, REP_PAD), const2),                   # b6
        pl.BlockSpec((REP_PAD, REP_PAD), const2),             # w7 (bf16, resident)
        pl.BlockSpec((1, REP_PAD), const2),                   # b7
        pl.BlockSpec((REP_PAD, OUT_PAD), const2),             # fused cls|box weight (bf16)
        pl.BlockSpec((1, OUT_PAD), const2),                   # fused cls|box bias
    ]
    out_specs = (
        pl.BlockSpec((tile_n, REP_PAD), lambda i: (i, 0)),    # box_logits (padded)
        pl.BlockSpec((tile_n, OUT_PAD), lambda i: (i, 0)),    # fused cls|box (padded)
    )
    out_shape = (
        jax.ShapeDtypeStruct((n_pad, REP_PAD), jnp.float32),
        jax.ShapeDtypeStruct((n_pad, OUT_PAD), jnp.float32),
    )

    flops = 2 * n_pad * (D_IN_PAD * REP_PAD + REP_PAD * REP_PAD + REP_PAD * OUT_PAD)
    bytes_accessed = (
        x_p.size * 4
        + (w6.size + w7.size + wcb.size) * 2          # bf16 weights
        + (b6.size + b7.size + bcb.size) * 4          # f32 biases
        + n_pad * (REP_PAD + OUT_PAD) * 4             # f32 outputs
    )

    feat_p, pred_p = pl.pallas_call(
        _box_head_kernel,
        out_shape=out_shape,
        grid=grid,
        in_specs=in_specs,
        out_specs=out_specs,
        compiler_params=pltpu.CompilerParams(
            dimension_semantics=("parallel",),        # ROI tiles split across TCs (v7x)
        ),
        cost_estimate=pl.CostEstimate(
            flops=flops, transcendentals=0, bytes_accessed=bytes_accessed),
    )(x_p, w6, b6, w7, b7, wcb, bcb)

    box_logits = feat_p[:n, :REP_SIZE]
    class_logits = pred_p[:n, :NUM_CLASSES]
    box_regression = pred_p[:n, NUM_CLASSES:NUM_CLASSES + BOX_DIM]
    return box_logits, class_logits, box_regression


# ------------------- plain-JAX glue: single-level ROIAlign pooler -------------------
# Gathers only the 4 bilinear corner values per sample point (no per-ROI copy of the
# whole feature map). sampling_ratio=1 (one sample per bin center), legacy coords.
# TODO(synk): fuse the ROIAlign gather into the Pallas kernel via PrefetchScalarGridSpec
#             (per-ROI DMA of needed feature rows) for production-scale feature maps.
def roi_align(features, rois, output_size, spatial_scale):
    """features: [B, C, H, W]; rois: [K, 5] = (batch_idx, x1, y1, x2, y2) image coords."""
    B, C, H, W = features.shape
    R = output_size
    bidx = rois[:, 0].astype(jnp.int32)
    x1 = rois[:, 1] * spatial_scale
    y1 = rois[:, 2] * spatial_scale
    x2 = rois[:, 3] * spatial_scale
    y2 = rois[:, 4] * spatial_scale
    bin_w = (x2 - x1) / R
    bin_h = (y2 - y1) / R
    ii = jnp.arange(R, dtype=jnp.float32) + 0.5
    sx = x1[:, None] + ii[None, :] * bin_w[:, None]     # [K, R]
    sy = y1[:, None] + ii[None, :] * bin_h[:, None]     # [K, R]

    yv = jnp.clip(sy, 0.0, H - 1.0)[:, :, None]         # [K, R, 1]
    xv = jnp.clip(sx, 0.0, W - 1.0)[:, None, :]         # [K, 1, R]
    y0 = jnp.floor(yv).astype(jnp.int32)
    x0 = jnp.floor(xv).astype(jnp.int32)
    y1i = jnp.minimum(y0 + 1, H - 1)
    x1i = jnp.minimum(x0 + 1, W - 1)
    ly = yv - y0.astype(jnp.float32)                    # [K, R, 1]
    lx = xv - x0.astype(jnp.float32)                    # [K, 1, R]
    b3 = bidx[:, None, None]                            # [K, 1, 1]

    def gather(yi, xi):
        # advanced indices (b3, yi, xi) broadcast to [K, R, R]; the ':' slice puts
        # the channel axis last -> [K, R, R, C]
        return features[b3, :, yi, xi]

    v00 = gather(y0, x0)
    v01 = gather(y0, x1i)
    v10 = gather(y1i, x0)
    v11 = gather(y1i, x1i)

    w00 = ((1.0 - ly) * (1.0 - lx))[..., None]
    w01 = ((1.0 - ly) * lx)[..., None]
    w10 = (ly * (1.0 - lx))[..., None]
    w11 = (ly * lx)[..., None]
    pooled = v00 * w00 + v01 * w01 + v10 * w10 + v11 * w11   # [K, R, R, C]
    return jnp.transpose(pooled, (0, 3, 1, 2))               # [K, C, R, R] (PyTorch order)


# ------------------- ROIBoxHead forward (eval semantics) -------------------
def roi_box_head_forward(features, rois, kernel_params):
    """Returns (box_logits, class_logits, box_regression) — eval-path compute.
    box_logits == pooled MLP features (as in the PyTorch module)."""
    pooled = roi_align(features, rois, POOL_RES, SPATIAL_SCALE)          # [K, C, R, R]
    x_flat = pooled.reshape(pooled.shape[0], -1).astype(jnp.float32)     # [K, C*R*R]
    box_logits, class_logits, box_regression = box_head_pallas(
        x_flat, kernel_params, tile_n=8)
    # TODO(synk): post_processor (softmax + box decode + per-class NMS), loss_evaluator
    # (proposal matching / fg-bg subsampling) and the train-only dropout path have no
    # clean Pallas equivalent; returning raw head outputs instead.
    return box_logits, class_logits, box_regression


# ------------------- deterministic parameter init + kernel packing -------------------
def make_params(key):
    d_in = D_IN
    ks = jax.random.split(key, 8)
    w6 = jax.random.normal(ks[0], (d_in, REP_SIZE), jnp.float32) * 0.02
    b6 = jnp.zeros((1, REP_SIZE), jnp.float32)
    w7 = jax.random.normal(ks[1], (REP_SIZE, REP_SIZE), jnp.float32) * 0.02
    b7 = jnp.zeros((1, REP_SIZE), jnp.float32)
    wc = jax.random.normal(ks[2], (REP_SIZE, NUM_CLASSES), jnp.float32) * 0.01
    bc = jnp.zeros((1, NUM_CLASSES), jnp.float32)
    wb = jax.random.normal(ks[3], (REP_SIZE, BOX_DIM), jnp.float32) * 0.001
    bb = jnp.zeros((1, BOX_DIM), jnp.float32)
    return (w6, b6, w7, b7, wc, bc, wb, bb)


def pack_params_for_kernel(params):
    """Zero-pad to 128-lane kernel shapes, fuse cls|box predictor, cast weights to bf16."""
    w6, b6, w7, b7, wc, bc, wb, bb = params

    def pad2(a, r, c):
        return jnp.zeros((r, c), a.dtype).at[:a.shape[0], :a.shape[1]].set(a)

    w6p = pad2(w6, D_IN_PAD, REP_PAD).astype(jnp.bfloat16)
    b6p = pad2(b6, 1, REP_PAD)
    w7p = pad2(w7, REP_PAD, REP_PAD).astype(jnp.bfloat16)
    b7p = pad2(b7, 1, REP_PAD)
    wcb = pad2(jnp.concatenate([wc, wb], axis=1), REP_PAD, OUT_PAD).astype(jnp.bfloat16)
    bcb = pad2(jnp.concatenate([bc, bb], axis=1), 1, OUT_PAD)
    return (w6p, b6p, w7p, b7p, wcb, bcb)


if __name__ == "__main__":
    key = jax.random.PRNGKey(0)
    kf, kb, kp = jax.random.split(key, 3)

    # features: batch=2, channels=4, spatial=16x16 (NCHW), image size = 64 (stride 4)
    features = jax.random.normal(kf, (2, IN_CHANNELS, 16, 16), jnp.float32)

    # proposals: 8 per image -> 16 ROIs as [batch_idx, x1, y1, x2, y2] in image coords
    n_per_img = 8
    xy = jax.random.uniform(kb, (2 * n_per_img, 2), minval=0.0, maxval=40.0)
    wh = jax.random.uniform(kp, (2 * n_per_img, 2), minval=8.0, maxval=20.0)
    batch_idx = jnp.repeat(jnp.arange(2, dtype=jnp.float32), n_per_img)[:, None]
    rois = jnp.concatenate([batch_idx, xy, jnp.minimum(xy + wh, 63.0)], axis=1)  # [16, 5]

    params = make_params(jax.random.PRNGKey(0))
    kernel_params = pack_params_for_kernel(params)

    box_logits, class_logits, box_regression = roi_box_head_forward(
        features, rois, kernel_params)
    jax.block_until_ready((box_logits, class_logits, box_regression))

    assert box_logits.shape == (16, REP_SIZE)
    assert class_logits.shape == (16, NUM_CLASSES)
    assert box_regression.shape == (16, BOX_DIM)
    assert bool(jnp.all(jnp.isfinite(box_logits)))
    assert bool(jnp.all(jnp.isfinite(class_logits)))
    assert bool(jnp.all(jnp.isfinite(box_regression)))
    print("KERNEL_OK")
</pallas_src>

<mosaic_0001>
module attributes {stable_mosaic.version = 11 : i64} {
  func.func @_box_head_kernel(%arg0: i32, %arg1: memref<8x128xf32, #tpu.memory_space<vmem>>, %arg2: memref<128x128xbf16, #tpu.memory_space<vmem>>, %arg3: memref<1x128xf32, #tpu.memory_space<vmem>>, %arg4: memref<128x128xbf16, #tpu.memory_space<vmem>>, %arg5: memref<1x128xf32, #tpu.memory_space<vmem>>, %arg6: memref<128x128xbf16, #tpu.memory_space<vmem>>, %arg7: memref<1x128xf32, #tpu.memory_space<vmem>>, %arg8: memref<8x128xf32, #tpu.memory_space<vmem>>, %arg9: memref<8x128xf32, #tpu.memory_space<vmem>>) attributes {dimension_semantics = [#tpu.dimension_semantics<parallel>], iteration_bounds = array<i64: 2>, scalar_prefetch = 0 : i64, scratch_operands = 0 : i64, tpu.core_type = #tpu.core_type<tc>, window_params = [{transform_indices = @transform_0, window_bounds = array<i64: 8, 128>}, {pipeline_mode = #tpu.pipeline_mode<synchronous>, transform_indices = @transform_1, window_bounds = array<i64: 128, 128>}, {pipeline_mode = #tpu.pipeline_mode<synchronous>, transform_indices = @transform_2, window_bounds = array<i64: 1, 128>}, {pipeline_mode = #tpu.pipeline_mode<synchronous>, transform_indices = @transform_3, window_bounds = array<i64: 128, 128>}, {pipeline_mode = #tpu.pipeline_mode<synchronous>, transform_indices = @transform_4, window_bounds = array<i64: 1, 128>}, {pipeline_mode = #tpu.pipeline_mode<synchronous>, transform_indices = @transform_5, window_bounds = array<i64: 128, 128>}, {pipeline_mode = #tpu.pipeline_mode<synchronous>, transform_indices = @transform_6, window_bounds = array<i64: 1, 128>}, {transform_indices = @transform_7, window_bounds = array<i64: 8, 128>}, {transform_indices = @transform_8, window_bounds = array<i64: 8, 128>}]} {
    %c0 = arith.constant 0 : index
    %c0_0 = arith.constant 0 : index
    %0 = vector.load %arg1[%c0, %c0_0] : memref<8x128xf32, #tpu.memory_space<vmem>>, vector<8x128xf32>
    %1 = arith.truncf %0 : vector<8x128xf32> to vector<8x128xbf16>
    %c0_1 = arith.constant 0 : index
    %c0_2 = arith.constant 0 : index
    %2 = vector.load %arg2[%c0_1, %c0_2] : memref<128x128xbf16, #tpu.memory_space<vmem>>, vector<128x128xbf16>
    %cst = arith.constant dense<0.000000e+00> : vector<8x128xf32>
    %3 = tpu.matmul %1, %2, %cst {dimension_numbers = #tpu.dot_dimension_numbers<[1], [0], [0], [1], [0, 0, 1, 1], [], []>} : vector<8x128xbf16>, vector<128x128xbf16>, vector<8x128xf32> -> vector<8x128xf32>
    %c0_3 = arith.constant 0 : index
    %c0_4 = arith.constant 0 : index
    %4 = vector.load %arg3[%c0_3, %c0_4] : memref<1x128xf32, #tpu.memory_space<vmem>>, vector<1x128xf32>
    %5 = vector.broadcast %4 : vector<1x128xf32> to vector<8x128xf32>
    %6 = arith.addf %3, %5 : vector<8x128xf32>
    %cst_5 = arith.constant 0.000000e+00 : f32
    %7 = vector.broadcast %cst_5 : f32 to vector<8x128xf32>
    %8 = arith.maximumf %6, %7 : vector<8x128xf32>
    %9 = arith.truncf %8 : vector<8x128xf32> to vector<8x128xbf16>
    %c0_6 = arith.constant 0 : index
    %c0_7 = arith.constant 0 : index
    %10 = vector.load %arg4[%c0_6, %c0_7] : memref<128x128xbf16, #tpu.memory_space<vmem>>, vector<128x128xbf16>
    %cst_8 = arith.constant dense<0.000000e+00> : vector<8x128xf32>
    %11 = tpu.matmul %9, %10, %cst_8 {dimension_numbers = #tpu.dot_dimension_numbers<[1], [0], [0], [1], [0, 0, 1, 1], [], []>} : vector<8x128xbf16>, vector<128x128xbf16>, vector<8x128xf32> -> vector<8x128xf32>
    %c0_9 = arith.constant 0 : index
    %c0_10 = arith.constant 0 : index
    %12 = vector.load %arg5[%c0_9, %c0_10] : memref<1x128xf32, #tpu.memory_space<vmem>>, vector<1x128xf32>
    %13 = vector.broadcast %12 : vector<1x128xf32> to vector<8x128xf32>
    %14 = arith.addf %11, %13 : vector<8x128xf32>
    %cst_11 = arith.constant 0.000000e+00 : f32
    %15 = vector.broadcast %cst_11 : f32 to vector<8x128xf32>
    %16 = arith.maximumf %14, %15 : vector<8x128xf32>
    %c0_12 = arith.constant 0 : index
    %c0_13 = arith.constant 0 : index
    %17 = vector.load %arg8[%c0_12, %c0_13] : memref<8x128xf32, #tpu.memory_space<vmem>>, vector<8x128xf32>
    tpu.vector_store %arg8[%c0_12, %c0_13], %16 {strides = array<i32>} : memref<8x128xf32, #tpu.memory_space<vmem>>, vector<8x128xf32>,
    %18 = arith.truncf %16 : vector<8x128xf32> to vector<8x128xbf16>
    %c0_14 = arith.constant 0 : index
    %c0_15 = arith.constant 0 : index
    %19 = vector.load %arg6[%c0_14, %c0_15] : memref<128x128xbf16, #tpu.memory_space<vmem>>, vector<128x128xbf16>
    %cst_16 = arith.constant dense<0.000000e+00> : vector<8x128xf32>
    %20 = tpu.matmul %18, %19, %cst_16 {dimension_numbers = #tpu.dot_dimension_numbers<[1], [0], [0], [1], [0, 0, 1, 1], [], []>} : vector<8x128xbf16>, vector<128x128xbf16>, vector<8x128xf32> -> vector<8x128xf32>
    %c0_17 = arith.constant 0 : index
    %c0_18 = arith.constant 0 : index
    %21 = vector.load %arg7[%c0_17, %c0_18] : memref<1x128xf32, #tpu.memory_space<vmem>>, vector<1x128xf32>
    %22 = vector.broadcast %21 : vector<1x128xf32> to vector<8x128xf32>
    %23 = arith.addf %20, %22 : vector<8x128xf32>
    %c0_19 = arith.constant 0 : index
    %c0_20 = arith.constant 0 : index
    %24 = vector.load %arg9[%c0_19, %c0_20] : memref<8x128xf32, #tpu.memory_space<vmem>>, vector<8x128xf32>
    tpu.vector_store %arg9[%c0_19, %c0_20], %23 {strides = array<i32>} : memref<8x128xf32, #tpu.memory_space<vmem>>, vector<8x128xf32>,
    return
  }
  func.func @transform_0(%arg0: i32) -> (i32, i32) {
    %c0_i32 = arith.constant 0 : i32
    %c0_i32_0 = arith.constant 0 : i32
    return %arg0, %c0_i32 : i32, i32
  }
  func.func @transform_1(%arg0: i32) -> (i32, i32) {
    %c0_i32 = arith.constant 0 : i32
    %c0_i32_0 = arith.constant 0 : i32
    %c0_i32_1 = arith.constant 0 : i32
    return %c0_i32, %c0_i32_0 : i32, i32
  }
  func.func @transform_2(%arg0: i32) -> (i32, i32) {
    %c0_i32 = arith.constant 0 : i32
    %c0_i32_0 = arith.constant 0 : i32
    %c0_i32_1 = arith.constant 0 : i32
    return %c0_i32, %c0_i32_0 : i32, i32
  }
  func.func @transform_3(%arg0: i32) -> (i32, i32) {
    %c0_i32 = arith.constant 0 : i32
    %c0_i32_0 = arith.constant 0 : i32
    %c0_i32_1 = arith.constant 0 : i32
    return %c0_i32, %c0_i32_0 : i32, i32
  }
  func.func @transform_4(%arg0: i32) -> (i32, i32) {
    %c0_i32 = arith.constant 0 : i32
    %c0_i32_0 = arith.constant 0 : i32
    %c0_i32_1 = arith.constant 0 : i32
    return %c0_i32, %c0_i32_0 : i32, i32
  }
  func.func @transform_5(%arg0: i32) -> (i32, i32) {
    %c0_i32 = arith.constant 0 : i32
    %c0_i32_0 = arith.constant 0 : i32
    %c0_i32_1 = arith.constant 0 : i32
    return %c0_i32, %c0_i32_0 : i32, i32
  }
  func.func @transform_6(%arg0: i32) -> (i32, i32) {
    %c0_i32 = arith.constant 0 : i32
    %c0_i32_0 = arith.constant 0 : i32
    %c0_i32_1 = arith.constant 0 : i32
    return %c0_i32, %c0_i32_0 : i32, i32
  }
  func.func @transform_7(%arg0: i32) -> (i32, i32) {
    %c0_i32 = arith.constant 0 : i32
    %c0_i32_0 = arith.constant 0 : i32
    return %arg0, %c0_i32 : i32, i32
  }
  func.func @transform_8(%arg0: i32) -> (i32, i32) {
    %c0_i32 = arith.constant 0 : i32
    %c0_i32_0 = arith.constant 0 : i32
    return %arg0, %c0_i32 : i32, i32
  }
}

</mosaic_0001>

<llo_original>
// kernel: tpu_custom_call.1
$region0: #{tpu_custom_call.1}
  #allocation0 [shape = 'u32[]', space=smem, size = 0x4, offset = 0x4, fixed_abs, tag = 'smem constant byte address 0x4 - core index']
  #allocation1 [shape = 'u32[72,128]{1,0:T(1,128)}', space=vmem, size = 0x9000, scoped, tag = 'internal scratch']
  %s0 = inlined_call_operand.hbm [shape: f32[16,128], index: 0, kind: input, shape index: {}]
  %s1 = inlined_call_operand.hbm [shape: bf16[128,128], index: 1, kind: input, shape index: {}]
  %s2 = inlined_call_operand.vmem [shape: f32[1,128], index: 2, kind: input, shape index: {}]
  %s3 = inlined_call_operand.hbm [shape: bf16[128,128], index: 3, kind: input, shape index: {}]
  %s4 = inlined_call_operand.vmem [shape: f32[1,128], index: 4, kind: input, shape index: {}]
  %s5 = inlined_call_operand.hbm [shape: bf16[128,128], index: 5, kind: input, shape index: {}]
  %s6 = inlined_call_operand.vmem [shape: f32[1,128], index: 6, kind: input, shape index: {}]
  %s7 = inlined_call_operand.hbm [shape: f32[16,128], index: 7, kind: output, shape index: {0}]
  %s8 = inlined_call_operand.hbm [shape: f32[16,128], index: 8, kind: output, shape index: {1}]
  %9 = xla_tuple %s7, %s8
  %s10 = sld [smem:[#allocation0]]
  $region85: #{tpu_custom_call.1} parent=0
    _
  %s12 = ssub.s32 1, %s10
  %s13 = scalar_select 0, %s12, %s10
  $region1: #{tpu_custom_call.1} parent=0
    #allocation2 [shape = 'u8[8192]{0}', space=vmem, size = 0x2000, scoped, tag = 'input window, operand 0']
    #allocation3 [shape = 's32[2]{0}', space=sflag, size = 0x8, scoped, tag = 'scoped memory for tpu_custom_call.1']
    #allocation4 [shape = 's32[2]{0}', space=sflag, size = 0x8, scoped, tag = 'scoped memory for tpu_custom_call.1']
    #allocation5 [shape = 'u8[32768]{0}', space=vmem, size = 0x8000, scoped, tag = 'input window, operand 1, single buffered']
    #allocation6 [shape = 's32[1]{0}', space=sflag, size = 0x4, scoped, tag = 'scoped memory for tpu_custom_call.1']
    #allocation7 [shape = 'u8[32768]{0}', space=vmem, size = 0x8000, scoped, tag = 'input window, operand 3, single buffered']
    #allocation8 [shape = 'u8[32768]{0}', space=vmem, size = 0x8000, scoped, tag = 'input window, operand 5, single buffered']
    #allocation9 [shape = 's32[1]{0}', space=sflag, size = 0x4, scoped, tag = 'scoped memory for tpu_custom_call.1']
    #allocation10 [shape = 'u8[8192]{0}', space=vmem, size = 0x2000, scoped, tag = 'output window, operand 0']
    #allocation11 [shape = 'u8[8192]{0}', space=vmem, size = 0x2000, scoped, tag = 'output window, operand 1']
    #allocation12 [shape = 's32[2]{0}', space=sflag, size = 0x8, scoped, tag = 'scoped memory for tpu_custom_call.1']
    %14 = vsyncpa [#allocation3], 0
    %s15 = scalar_lea.sflag [#allocation3], 1
    %16 = vsyncpa %s15, 0
    %17 = vsyncpa [#allocation6], 0
    %18 = vsyncpa [#allocation9], 0
    %19 = vsyncpa [#allocation4], 0
    %s20 = scalar_lea.sflag [#allocation4], 1
    %21 = vsyncpa %s20, 0
    %22 = vsyncpa [#allocation12], 0
    %s23 = scalar_lea.sflag [#allocation12], 1
    %24 = vsyncpa %s23, 0
    loop: start=0, step=1, limit=4
    $region2: #{tpu_custom_call.1} parent=1 // loop_pre_header
      _
    $region3: #{tpu_custom_call.1} parent=1 // loop_header
      %s26 = sphi 0, %s30
      %p27 = scmp.ge.s32.totalorder %s26, 4
      %s36 = sphi 0, %s38
      %s39 = sphi 0, %s36
      %s40 = sphi 0, %s39
      %s56 = sphi 0, %s40
      %s60 = sphi 0, %s60
      %s62 = sphi 0, %s60
      %s63 = sphi 0, %s62
      %s77 = sphi 0, %s63
      %s81 = sphi 0, %s81
      %s83 = sphi 0, %s81
      %s84 = sphi 0, %s83
      %s98 = sphi 0, %s84
      %s102 = sphi 0, %s102
      %s104 = sphi 0, %s102
      %s105 = sphi 0, %s104
      %s119 = sphi 0, %s105
      %s123 = sphi 0, %s123
      %s125 = sphi 0, %s123
      %s126 = sphi 0, %s125
      %s140 = sphi 0, %s126
      %s144 = sphi 0, %s144
      %s146 = sphi 0, %s144
      %s147 = sphi 0, %s146
      %s161 = sphi 0, %s147
      %s165 = sphi 0, %s165
      %s167 = sphi 0, %s165
      %s168 = sphi 0, %s167
      %s182 = sphi 0, %s168
      %s188 = sphi 0, %s190
      %s191 = sphi 0, %s188
      %s192 = sphi 0, %s191
      %s208 = sphi 0, %s192
      %s214 = sphi 0, %s216
      %s217 = sphi 0, %s214
      %s218 = sphi 0, %s217
      %s234 = sphi 0, %s218
    $region4: #{tpu_custom_call.1} parent=1 // loop_header_branch
      %29 = sbr.rel (%p27) target = $region8
    $region5: #{tpu_custom_call.1} parent=1 // loop_body
      %s31 = ssub.s32 %s26, 1
      %s32 = ssub.s32 %s26, 2
      %s33 = sadd.s32 %s26, 1
      %s34 = ssub.s32 %s26, %s33
      %p35 = scmp.eq.s32.totalorder %s34, 0
      %s37 = sadd.s32 %s36, 1
      %s38 = scalar_select %p35, %s36, %s37
      %p41 = pneg %p35
      %p42 = scmp.eq.s32.totalorder %s26, 1
      %p43 = por %p41, %p42
      %p44 = scmp.ne.s32.totalorder %s36, %s39
      %p45 = scmp.eq.s32.totalorder %s26, 0
      %p46 = por %p44, %p45
      %p47 = scmp.ne.s32.totalorder %s36, %s39
      %p48 = scmp.eq.s32.totalorder %s31, 1
      %p49 = por %p47, %p48
      %p50 = scmp.ne.s32.totalorder %s39, %s40
      %p51 = scmp.eq.s32.totalorder %s31, 0
      %p52 = por %p50, %p51
      %p53 = scmp.ne.s32.totalorder %s39, %s40
      %p54 = scmp.eq.s32.totalorder %s32, 1
      %p55 = por %p53, %p54
      %p57 = scmp.ne.s32.totalorder %s40, %s56
      %p58 = scmp.eq.s32.totalorder %s32, 0
      %p59 = por %p57, %p58
      %s61 = sadd.s32 %s60, 1
      %p64 = scmp.eq.s32.totalorder %s26, 1
      %p65 = scmp.ne.s32.totalorder %s60, %s62
      %p66 = scmp.eq.s32.totalorder %s26, 0
      %p67 = por %p65, %p66
      %p68 = scmp.ne.s32.totalorder %s60, %s62
      %p69 = scmp.eq.s32.totalorder %s31, 1
      %p70 = por %p68, %p69
      %p71 = scmp.ne.s32.totalorder %s62, %s63
      %p72 = scmp.eq.s32.totalorder %s31, 0
      %p73 = por %p71, %p72
      %p74 = scmp.ne.s32.totalorder %s62, %s63
      %p75 = scmp.eq.s32.totalorder %s32, 1
      %p76 = por %p74, %p75
      %p78 = scmp.ne.s32.totalorder %s63, %s77
      %p79 = scmp.eq.s32.totalorder %s32, 0
      %p80 = por %p78, %p79
      %s82 = sadd.s32 %s81, 1
      %p85 = scmp.eq.s32.totalorder %s26, 1
      %p86 = scmp.ne.s32.totalorder %s81, %s83
      %p87 = scmp.eq.s32.totalorder %s26, 0
      %p88 = por %p86, %p87
      %p89 = scmp.ne.s32.totalorder %s81, %s83
      %p90 = scmp.eq.s32.totalorder %s31, 1
      %p91 = por %p89, %p90
      %p92 = scmp.ne.s32.totalorder %s83, %s84
      %p93 = scmp.eq.s32.totalorder %s31, 0
      %p94 = por %p92, %p93
      %p95 = scmp.ne.s32.totalorder %s83, %s84
      %p96 = scmp.eq.s32.totalorder %s32, 1
      %p97 = por %p95, %p96
      %p99 = scmp.ne.s32.totalorder %s84, %s98
      %p100 = scmp.eq.s32.totalorder %s32, 0
      %p101 = por %p99, %p100
      %s103 = sadd.s32 %s102, 1
      %p106 = scmp.eq.s32.totalorder %s26, 1
      %p107 = scmp.ne.s32.totalorder %s102, %s104
      %p108 = scmp.eq.s32.totalorder %s26, 0
      %p109 = por %p107, %p108
      %p110 = scmp.ne.s32.totalorder %s102, %s104
      %p111 = scmp.eq.s32.totalorder %s31, 1
      %p112 = por %p110, %p111
      %p113 = scmp.ne.s32.totalorder %s104, %s105
      %p114 = scmp.eq.s32.totalorder %s31, 0
      %p115 = por %p113, %p114
      %p116 = scmp.ne.s32.totalorder %s104, %s105
      %p117 = scmp.eq.s32.totalorder %s32, 1
      %p118 = por %p116, %p117
      %p120 = scmp.ne.s32.totalorder %s105, %s119
      %p121 = scmp.eq.s32.totalorder %s32, 0
      %p122 = por %p120, %p121
      %s124 = sadd.s32 %s123, 1
      %p127 = scmp.eq.s32.totalorder %s26, 1
      %p128 = scmp.ne.s32.totalorder %s123, %s125
      %p129 = scmp.eq.s32.totalorder %s26, 0
      %p130 = por %p128, %p129
      %p131 = scmp.ne.s32.totalorder %s123, %s125
      %p132 = scmp.eq.s32.totalorder %s31, 1
      %p133 = por %p131, %p132
      %p134 = scmp.ne.s32.totalorder %s125, %s126
      %p135 = scmp.eq.s32.totalorder %s31, 0
      %p136 = por %p134, %p135
      %p137 = scmp.ne.s32.totalorder %s125, %s126
      %p138 = scmp.eq.s32.totalorder %s32, 1
      %p139 = por %p137, %p138
      %p141 = scmp.ne.s32.totalorder %s126, %s140
      %p142 = scmp.eq.s32.totalorder %s32, 0
      %p143 = por %p141, %p142
      %s145 = sadd.s32 %s144, 1
      %p148 = scmp.eq.s32.totalorder %s26, 1
      %p149 = scmp.ne.s32.totalorder %s144, %s146
      %p150 = scmp.eq.s32.totalorder %s26, 0
      %p151 = por %p149, %p150
      %p152 = scmp.ne.s32.totalorder %s144, %s146
      %p153 = scmp.eq.s32.totalorder %s31, 1
      %p154 = por %p152, %p153
      %p155 = scmp.ne.s32.totalorder %s146, %s147
      %p156 = scmp.eq.s32.totalorder %s31, 0
      %p157 = por %p155, %p156
      %p158 = scmp.ne.s32.totalorder %s146, %s147
      %p159 = scmp.eq.s32.totalorder %s32, 1
      %p160 = por %p158, %p159
      %p162 = scmp.ne.s32.totalorder %s147, %s161
      %p163 = scmp.eq.s32.totalorder %s32, 0
      %p164 = por %p162, %p163
      %s166 = sadd.s32 %s165, 1
      %p169 = scmp.eq.s32.totalorder %s26, 1
      %p170 = scmp.ne.s32.totalorder %s165, %s167
      %p171 = scmp.eq.s32.totalorder %s26, 0
      %p172 = por %p170, %p171
      %p173 = scmp.ne.s32.totalorder %s165, %s167
      %p174 = scmp.eq.s32.totalorder %s31, 1
      %p175 = por %p173, %p174
      %p176 = scmp.ne.s32.totalorder %s167, %s168
      %p177 = scmp.eq.s32.totalorder %s31, 0
      %p178 = por %p176, %p177
      %p179 = scmp.ne.s32.totalorder %s167, %s168
      %p180 = scmp.eq.s32.totalorder %s32, 1
      %p181 = por %p179, %p180
      %p183 = scmp.ne.s32.totalorder %s168, %s182
      %p184 = scmp.eq.s32.totalorder %s32, 0
      %p185 = por %p183, %p184
      %s186 = ssub.s32 %s26, %s33
      %p187 = scmp.eq.s32.totalorder %s186, 0
      %s189 = sadd.s32 %s188, 1
      %s190 = scalar_select %p187, %s188, %s189
      %p193 = pneg %p187
      %p194 = scmp.eq.s32.totalorder %s26, 1
      %p195 = por %p193, %p194
      %p196 = scmp.ne.s32.totalorder %s188, %s191
      %p197 = scmp.eq.s32.totalorder %s26, 0
      %p198 = por %p196, %p197
      %p199 = scmp.ne.s32.totalorder %s188, %s191
      %p200 = scmp.eq.s32.totalorder %s31, 1
      %p201 = por %p199, %p200
      %p202 = scmp.ne.s32.totalorder %s191, %s192
      %p203 = scmp.eq.s32.totalorder %s31, 0
      %p204 = por %p202, %p203
      %p205 = scmp.ne.s32.totalorder %s191, %s192
      %p206 = scmp.eq.s32.totalorder %s32, 1
      %p207 = por %p205, %p206
      %p209 = scmp.ne.s32.totalorder %s192, %s208
      %p210 = scmp.eq.s32.totalorder %s32, 0
      %p211 = por %p209, %p210
      %s212 = ssub.s32 %s26, %s33
      %p213 = scmp.eq.s32.totalorder %s212, 0
      %s215 = sadd.s32 %s214, 1
      %s216 = scalar_select %p213, %s214, %s215
      %p219 = pneg %p213
      %p220 = scmp.eq.s32.totalorder %s26, 1
      %p221 = por %p219, %p220
      %p222 = scmp.ne.s32.totalorder %s214, %s217
      %p223 = scmp.eq.s32.totalorder %s26, 0
      %p224 = por %p222, %p223
      %p225 = scmp.ne.s32.totalorder %s214, %s217
      %p226 = scmp.eq.s32.totalorder %s31, 1
      %p227 = por %p225, %p226
      %p228 = scmp.ne.s32.totalorder %s217, %s218
      %p229 = scmp.eq.s32.totalorder %s31, 0
      %p230 = por %p228, %p229
      %p231 = scmp.ne.s32.totalorder %s217, %s218
      %p232 = scmp.eq.s32.totalorder %s32, 1
      %p233 = por %p231, %p232
      %p235 = scmp.ne.s32.totalorder %s218, %s234
      %p236 = scmp.eq.s32.totalorder %s32, 0
      %p237 = por %p235, %p236
      %p238 = scmp.le.s32.totalorder 1, %s26
      %p239 = scmp.lt.s32.totalorder %s26, 3
      %p240 = pnand %p238, %p239
      %p241 = pneg %p240
      // Predicated region
      $region9: #{tpu_custom_call.1} parent=5 // pred_check
        _
      $region10: #{tpu_custom_call.1} parent=5 // pred_check_branch
        %243 = sbr.rel (%p240) target = $region12
      $region11: #{tpu_custom_call.1} parent=5 // pred_region
        %s244 = ssub.s32 %s26, 1
        // Predicated region
        $region13: #{tpu_custom_call.1} parent=11 // pred_check
          %p245 = pneg %p73
        $region14: #{tpu_custom_call.1} parent=11 // pred_check_branch
          %247 = sbr.rel (%p245) target = $region16
        $region15: #{tpu_custom_call.1} parent=11 // pred_region
          %249 = vsyncadd [#allocation6], 0
          %s250 = sshll.u32 %s1, 4
          %s251 = int_to_ptr.hbm [resolvable:$true] %s250
          %s252 = sshll.u32 [#allocation5], 4
          %s253 = int_to_ptr.vmem [resolvable:$true] %s252
          %258 = dma.hbm_to_vmem [thread:$0]  %s251, 1024, %s253, [#allocation6], 64, 64, 4
        $region16: #{tpu_custom_call.1} parent=11 // pred_fallthru
          _
        // Predicated region
        $region17: #{tpu_custom_call.1} parent=11 // pred_check
          %p259 = pneg %p94
        $region18: #{tpu_custom_call.1} parent=11 // pred_check_branch
          %261 = sbr.rel (%p259) target = $region20
        $region19: #{tpu_custom_call.1} parent=11 // pred_region
          _
        $region20: #{tpu_custom_call.1} parent=11 // pred_fallthru
          _
        // Predicated region
        $region21: #{tpu_custom_call.1} parent=11 // pred_check
          %p262 = pneg %p115
        $region22: #{tpu_custom_call.1} parent=11 // pred_check_branch
          %264 = sbr.rel (%p262) target = $region24
        $region23: #{tpu_custom_call.1} parent=11 // pred_region
          %266 = vsyncadd [#allocation6], 0
          %s267 = sshll.u32 %s3, 4
          %s268 = int_to_ptr.hbm [resolvable:$true] %s267
          %s269 = sshll.u32 [#allocation7], 4
          %s270 = int_to_ptr.vmem [resolvable:$true] %s269
          %275 = dma.hbm_to_vmem [thread:$0]  %s268, 1024, %s270, [#allocation6], 64, 64, 4
        $region24: #{tpu_custom_call.1} parent=11 // pred_fallthru
          _
        // Predicated region
        $region25: #{tpu_custom_call.1} parent=11 // pred_check
          %p276 = pneg %p136
        $region26: #{tpu_custom_call.1} parent=11 // pred_check_branch
          %278 = sbr.rel (%p276) target = $region28
        $region27: #{tpu_custom_call.1} parent=11 // pred_region
          _
        $region28: #{tpu_custom_call.1} parent=11 // pred_fallthru
          _
        // Predicated region
        $region29: #{tpu_custom_call.1} parent=11 // pred_check
          %p279 = pneg %p157
        $region30: #{tpu_custom_call.1} parent=11 // pred_check_branch
          %281 = sbr.rel (%p279) target = $region32
        $region31: #{tpu_custom_call.1} parent=11 // pred_region
          %283 = vsyncadd [#allocation9], 0
          %s284 = sshll.u32 %s5, 4
          %s285 = int_to_ptr.hbm [resolvable:$true] %s284
          %s286 = sshll.u32 [#allocation8], 4
          %s287 = int_to_ptr.vmem [resolvable:$true] %s286
          %292 = dma.hbm_to_vmem [thread:$0]  %s285, 1024, %s287, [#allocation9], 64, 64, 4
        $region32: #{tpu_custom_call.1} parent=11 // pred_fallthru
          _
        // Predicated region
        $region33: #{tpu_custom_call.1} parent=11 // pred_check
          %p293 = pneg %p178
        $region34: #{tpu_custom_call.1} parent=11 // pred_check_branch
          %295 = sbr.rel (%p293) target = $region36
        $region35: #{tpu_custom_call.1} parent=11 // pred_region
          _
        $region36: #{tpu_custom_call.1} parent=11 // pred_fallthru
          _
      $region12: #{tpu_custom_call.1} parent=5 // pred_fallthru
        _
      %p296 = scmp.lt.s32.totalorder %s26, 2
      // Predicated region
      $region37: #{tpu_custom_call.1} parent=5 // pred_check
        %p297 = pneg %p296
      $region38: #{tpu_custom_call.1} parent=5 // pred_check_branch
        %299 = sbr.rel (%p297) target = $region40
      $region39: #{tpu_custom_call.1} parent=5 // pred_region
        // Predicated region
        $region41: #{tpu_custom_call.1} parent=39 // pred_check
          %p300 = pneg %p46
        $region42: #{tpu_custom_call.1} parent=39 // pred_check_branch
          %302 = sbr.rel (%p300) target = $region44
        $region43: #{tpu_custom_call.1} parent=39 // pred_region
          %s303 = sand.u32 %s36, 1
          %s304 = scalar_lea.sflag [#allocation3], %s303
          %s305 = sand.u32 %s36, 1
          %s306 = smul.addr %s305, 8
          %s307 = scalar_lea.vmem [#allocation2], %s306
          %309 = vsyncadd %s304, 0
          %s310 = smul.addr %s26, 8
          %s311 = scalar_lea.hbm %s0, %s310
          %s313 = sshll.u32 %s311, 4
          %s314 = int_to_ptr.hbm [resolvable:$true] %s313
          %s315 = sshll.u32 %s307, 4
          %s316 = int_to_ptr.vmem [resolvable:$true] %s315
          %318 = dma.hbm_to_vmem [thread:$0]  %s314, 128, %s316, %s304
        $region44: #{tpu_custom_call.1} parent=39 // pred_fallthru
          _
      $region40: #{tpu_custom_call.1} parent=5 // pred_fallthru
        _
      %p319 = scmp.le.s32.totalorder 1, %s26
      %p320 = scmp.lt.s32.totalorder %s26, 3
      %p321 = pnand %p319, %p320
      %p322 = pneg %p321
      // Predicated region
      $region45: #{tpu_custom_call.1} parent=5 // pred_check
        _
      $region46: #{tpu_custom_call.1} parent=5 // pred_check_branch
        %324 = sbr.rel (%p321) target = $region48
      $region47: #{tpu_custom_call.1} parent=5 // pred_region
        %s325 = ssub.s32 %s26, 1
        %s326 = sand.u32 %s39, 1
        %s327 = scalar_lea.sflag [#allocation3], %s326
        %s328 = sand.u32 %s39, 1
        %s329 = smul.addr %s328, 8
        %s330 = scalar_lea.vmem [#allocation2], %s329
        // Predicated region
        $region49: #{tpu_custom_call.1} parent=47 // pred_check
          %p331 = pneg %p52
        $region50: #{tpu_custom_call.1} parent=47 // pred_check_branch
          %333 = sbr.rel (%p331) target = $region52
        $region51: #{tpu_custom_call.1} parent=47 // pred_region
          %335 = dma.done %s327, 128
        $region52: #{tpu_custom_call.1} parent=47 // pred_fallthru
          _
        // Predicated region
        $region53: #{tpu_custom_call.1} parent=47 // pred_check
          %p336 = pneg %p73
        $region54: #{tpu_custom_call.1} parent=47 // pred_check_branch
          %338 = sbr.rel (%p336) target = $region56
        $region55: #{tpu_custom_call.1} parent=47 // pred_region
          %340 = dma.done [#allocation6], 1024
        $region56: #{tpu_custom_call.1} parent=47 // pred_fallthru
          _
        // Predicated region
        $region57: #{tpu_custom_call.1} parent=47 // pred_check
          %p341 = pneg %p115
        $region58: #{tpu_custom_call.1} parent=47 // pred_check_branch
          %343 = sbr.rel (%p341) target = $region60
        $region59: #{tpu_custom_call.1} parent=47 // pred_region
          %345 = dma.done [#allocation6], 1024
        $region60: #{tpu_custom_call.1} parent=47 // pred_fallthru
          _
        // Predicated region
        $region61: #{tpu_custom_call.1} parent=47 // pred_check
          %p346 = pneg %p157
        $region62: #{tpu_custom_call.1} parent=47 // pred_check_branch
          %348 = sbr.rel (%p346) target = $region64
        $region63: #{tpu_custom_call.1} parent=47 // pred_region
          %350 = dma.done [#allocation9], 1024
        $region64: #{tpu_custom_call.1} parent=47 // pred_fallthru
          _
        %s351 = sand.u32 %s39, 1
        %s352 = scalar_lea.sflag [#allocation3], %s351
        %s353 = sand.u32 %s39, 1
        %s354 = smul.addr %s353, 8
        %s355 = scalar_lea.vmem [#allocation2], %s354
        %p356 = pneg %p52
        %p357 = pneg %p49
        %p358 = pneg %p73
        %p359 = pneg %p70
        %p360 = pneg %p94
        %p361 = pneg %p91
        %p362 = pneg %p115
        %p363 = pneg %p112
        %p364 = pneg %p136
        %p365 = pneg %p133
        %p366 = pneg %p157
        %p367 = pneg %p154
        %p368 = pneg %p178
        %p369 = pneg %p175
        %p370 = pneg %p204
        %p371 = pneg %p201
        %s372 = sand.u32 %s191, 1
        %s373 = scalar_lea.sflag [#allocation4], %s372
        %s374 = sand.u32 %s191, 1
        %s375 = smul.addr %s374, 8
        %s376 = scalar_lea.vmem [#allocation10], %s375
        %p377 = pneg %p230
        %p378 = pneg %p227
        %s379 = sand.u32 %s217, 1
        %s380 = scalar_lea.sflag [#allocation12], %s379
        %s381 = sand.u32 %s217, 1
        %s382 = smul.addr %s381, 8
        %s383 = scalar_lea.vmem [#allocation11], %s382
        %v384 = vld [vmem:[%s330] sm:$0xff]
        %v385 = vpack.c.bf16 %v384, %v384
        %v386 = vld [vmem:[#allocation5] sm:$0xf]
        %v387 = vld [vmem:[#allocation5 + $0x4] sm:$0xf]
        %v388 = vld [vmem:[#allocation5 + $0x8] sm:$0xf]
        %v389 = vld [vmem:[#allocation5 + $0xc] sm:$0xf]
        %v390 = vld [vmem:[#allocation5 + $0x10] sm:$0xf]
        %v391 = vld [vmem:[#allocation5 + $0x14] sm:$0xf]
        %v392 = vld [vmem:[#allocation5 + $0x18] sm:$0xf]
        %v393 = vld [vmem:[#allocation5 + $0x1c] sm:$0xf]
        %v394 = vld [vmem:[#allocation5 + $0x20] sm:$0xf]
        %v395 = vld [vmem:[#allocation5 + $0x24] sm:$0xf]
        %v396 = vld [vmem:[#allocation5 + $0x28] sm:$0xf]
        %v397 = vld [vmem:[#allocation5 + $0x2c] sm:$0xf]
        %v398 = vld [vmem:[#allocation5 + $0x30] sm:$0xf]
        %v399 = vld [vmem:[#allocation5 + $0x34] sm:$0xf]
        %v400 = vld [vmem:[#allocation5 + $0x38] sm:$0xf]
        %v401 = vld [vmem:[#allocation5 + $0x3c] sm:$0xf]
        %v402 = vld [vmem:[%s2] sm:$0x1]
        %v404 = vperm.slane %v402, 0
        %v422 = vunpack.c.l.b16 %v386
        %v423 = vunpack.c.l.b16 %v387
        %v424 = vunpack.c.l.b16 %v388
        %v425 = vunpack.c.l.b16 %v389
        %v426 = vunpack.c.l.b16 %v390
        %v427 = vunpack.c.l.b16 %v391
        %v428 = vunpack.c.l.b16 %v392
        %v429 = vunpack.c.l.b16 %v393
        %v430 = vunpack.c.l.b16 %v394
        %v431 = vunpack.c.l.b16 %v395
        %v432 = vunpack.c.l.b16 %v396
        %v433 = vunpack.c.l.b16 %v397
        %v434 = vunpack.c.l.b16 %v398
        %v435 = vunpack.c.l.b16 %v399
        %v436 = vunpack.c.l.b16 %v400
        %v437 = vunpack.c.l.b16 %v401
        %v438 = vpack.c.b16 %v423, %v422
        %v439 = vpack.c.b16 %v425, %v424
        %v440 = vpack.c.b16 %v427, %v426
        %v441 = vpack.c.b16 %v429, %v428
        %v442 = vpack.c.b16 %v431, %v430
        %v443 = vpack.c.b16 %v433, %v432
        %v444 = vpack.c.b16 %v435, %v434
        %v445 = vpack.c.b16 %v437, %v436
        %454 = vmatpush.bf16.msra.mxu0 %v445
        %455 = vmatpush.bf16.msra.mxu0 %v444
        %456 = vmatpush.bf16.msra.mxu0 %v443
        %457 = vmatpush.bf16.msra.mxu0 %v442
        %458 = vmatpush.bf16.msra.mxu0 %v441
        %459 = vmatpush.bf16.msra.mxu0 %v440
        %460 = vmatpush.bf16.msra.mxu0 %v439
        %461 = vmatpush.bf16.msra.mxu0 %v438
        %462 = vmatmul.bf16.gmra.mxu0 %v385
        %v463 = vpop.f32.mrf.mxu0
        %v464 = vadd.f32 %v404, %v463
        %v465 = vpop.f32.mrf.mxu0
        %466 = vdwg.mxu0
        %v467 = vmax.f32 %v464, 0.0
        %v468 = vpack.c.bf16 %v467, %v467
        %v469 = vld [vmem:[#allocation7] sm:$0xf]
        %v470 = vld [vmem:[#allocation7 + $0x4] sm:$0xf]
        %v471 = vld [vmem:[#allocation7 + $0x8] sm:$0xf]
        %v472 = vld [vmem:[#allocation7 + $0xc] sm:$0xf]
        %v473 = vld [vmem:[#allocation7 + $0x10] sm:$0xf]
        %v474 = vld [vmem:[#allocation7 + $0x14] sm:$0xf]
        %v475 = vld [vmem:[#allocation7 + $0x18] sm:$0xf]
        %v476 = vld [vmem:[#allocation7 + $0x1c] sm:$0xf]
        %v477 = vld [vmem:[#allocation7 + $0x20] sm:$0xf]
        %v478 = vld [vmem:[#allocation7 + $0x24] sm:$0xf]
        %v479 = vld [vmem:[#allocation7 + $0x28] sm:$0xf]
        %v480 = vld [vmem:[#allocation7 + $0x2c] sm:$0xf]
        %v481 = vld [vmem:[#allocation7 + $0x30] sm:$0xf]
        %v482 = vld [vmem:[#allocation7 + $0x34] sm:$0xf]
        %v483 = vld [vmem:[#allocation7 + $0x38] sm:$0xf]
        %v484 = vld [vmem:[#allocation7 + $0x3c] sm:$0xf]
        %v485 = vld [vmem:[%s4] sm:$0x1]
        %v487 = vperm.slane %v485, 0
        %v505 = vunpack.c.l.b16 %v469
        %v506 = vunpack.c.l.b16 %v470
        %v507 = vunpack.c.l.b16 %v471
        %v508 = vunpack.c.l.b16 %v472
        %v509 = vunpack.c.l.b16 %v473
        %v510 = vunpack.c.l.b16 %v474
        %v511 = vunpack.c.l.b16 %v475
        %v512 = vunpack.c.l.b16 %v476
        %v513 = vunpack.c.l.b16 %v477
        %v514 = vunpack.c.l.b16 %v478
        %v515 = vunpack.c.l.b16 %v479
        %v516 = vunpack.c.l.b16 %v480
        %v517 = vunpack.c.l.b16 %v481
        %v518 = vunpack.c.l.b16 %v482
        %v519 = vunpack.c.l.b16 %v483
        %v520 = vunpack.c.l.b16 %v484
        %v521 = vpack.c.b16 %v506, %v505
        %v522 = vpack.c.b16 %v508, %v507
        %v523 = vpack.c.b16 %v510, %v509
        %v524 = vpack.c.b16 %v512, %v511
        %v525 = vpack.c.b16 %v514, %v513
        %v526 = vpack.c.b16 %v516, %v515
        %v527 = vpack.c.b16 %v518, %v517
        %v528 = vpack.c.b16 %v520, %v519
        %537 = vmatpush.bf16.msra.mxu0 %v528
        %538 = vmatpush.bf16.msra.mxu0 %v527
        %539 = vmatpush.bf16.msra.mxu0 %v526
        %540 = vmatpush.bf16.msra.mxu0 %v525
        %541 = vmatpush.bf16.msra.mxu0 %v524
        %542 = vmatpush.bf16.msra.mxu0 %v523
        %543 = vmatpush.bf16.msra.mxu0 %v522
        %544 = vmatpush.bf16.msra.mxu0 %v521
        %545 = vmatmul.bf16.gmra.mxu0 %v468
        %v546 = vpop.f32.mrf.mxu0
        %v547 = vadd.f32 %v487, %v546
        %v548 = vpop.f32.mrf.mxu0
        %549 = vdwg.mxu0
        %v550 = vmax.f32 %v547, 0.0
        %551 = vst [vmem:[%s376] sm:$0xff] %v550
        %v552 = vpack.c.bf16 %v550, %v550
        %v553 = vld [vmem:[#allocation8] sm:$0xf]
        %v554 = vld [vmem:[#allocation8 + $0x4] sm:$0xf]
        %v555 = vld [vmem:[#allocation8 + $0x8] sm:$0xf]
        %v556 = vld [vmem:[#allocation8 + $0xc] sm:$0xf]
        %v557 = vld [vmem:[#allocation8 + $0x10] sm:$0xf]
        %v558 = vld [vmem:[#allocation8 + $0x14] sm:$0xf]
        %v559 = vld [vmem:[#allocation8 + $0x18] sm:$0xf]
        %v560 = vld [vmem:[#allocation8 + $0x1c] sm:$0xf]
        %v561 = vld [vmem:[#allocation8 + $0x20] sm:$0xf]
        %v562 = vld [vmem:[#allocation8 + $0x24] sm:$0xf]
        %v563 = vld [vmem:[#allocation8 + $0x28] sm:$0xf]
        %v564 = vld [vmem:[#allocation8 + $0x2c] sm:$0xf]
        %v565 = vld [vmem:[#allocation8 + $0x30] sm:$0xf]
        %v566 = vld [vmem:[#allocation8 + $0x34] sm:$0xf]
        %v567 = vld [vmem:[#allocation8 + $0x38] sm:$0xf]
        %v568 = vld [vmem:[#allocation8 + $0x3c] sm:$0xf]
        %v569 = vld [vmem:[%s6] sm:$0x1]
        %v571 = vperm.slane %v569, 0
        %v589 = vunpack.c.l.b16 %v553
        %v590 = vunpack.c.l.b16 %v554
        %v591 = vunpack.c.l.b16 %v555
        %v592 = vunpack.c.l.b16 %v556
        %v593 = vunpack.c.l.b16 %v557
        %v594 = vunpack.c.l.b16 %v558
        %v595 = vunpack.c.l.b16 %v559
        %v596 = vunpack.c.l.b16 %v560
        %v597 = vunpack.c.l.b16 %v561
        %v598 = vunpack.c.l.b16 %v562
        %v599 = vunpack.c.l.b16 %v563
        %v600 = vunpack.c.l.b16 %v564
        %v601 = vunpack.c.l.b16 %v565
        %v602 = vunpack.c.l.b16 %v566
        %v603 = vunpack.c.l.b16 %v567
        %v604 = vunpack.c.l.b16 %v568
        %v605 = vpack.c.b16 %v590, %v589
        %v606 = vpack.c.b16 %v592, %v591
        %v607 = vpack.c.b16 %v594, %v593
        %v608 = vpack.c.b16 %v596, %v595
        %v609 = vpack.c.b16 %v598, %v597
        %v610 = vpack.c.b16 %v600, %v599
        %v611 = vpack.c.b16 %v602, %v601
        %v612 = vpack.c.b16 %v604, %v603
        %621 = vmatpush.bf16.msra.mxu0 %v612
        %622 = vmatpush.bf16.msra.mxu0 %v611
        %623 = vmatpush.bf16.msra.mxu0 %v610
        %624 = vmatpush.bf16.msra.mxu0 %v609
        %625 = vmatpush.bf16.msra.mxu0 %v608
        %626 = vmatpush.bf16.msra.mxu0 %v607
        %627 = vmatpush.bf16.msra.mxu0 %v606
        %628 = vmatpush.bf16.msra.mxu0 %v605
        %629 = vmatmul.bf16.gmra.mxu0 %v552
        %v630 = vpop.f32.mrf.mxu0
        %v631 = vadd.f32 %v571, %v630
        %v632 = vpop.f32.mrf.mxu0
        %633 = vdwg.mxu0
        %634 = vst [vmem:[%s383] sm:$0xff] %v631
        %s635 = sand.u32 %s191, 1
        %s636 = scalar_lea.sflag [#allocation4], %s635
        %s637 = sand.u32 %s191, 1
        %s638 = smul.addr %s637, 8
        %s639 = scalar_lea.vmem [#allocation10], %s638
        %s640 = sand.u32 %s217, 1
        %s641 = scalar_lea.sflag [#allocation12], %s640
        %s642 = sand.u32 %s217, 1
        %s643 = smul.addr %s642, 8
        %s644 = scalar_lea.vmem [#allocation11], %s643
        // Predicated region
        $region65: #{tpu_custom_call.1} parent=47 // pred_check
          %p645 = pneg %p201
        $region66: #{tpu_custom_call.1} parent=47 // pred_check_branch
          %647 = sbr.rel (%p645) target = $region68
        $region67: #{tpu_custom_call.1} parent=47 // pred_region
          %649 = vsyncadd %s636, 0
          %s650 = smul.addr %s31, 8
          %s651 = scalar_lea.hbm %s7, %s650
          %s653 = sshll.u32 %s639, 4
          %s654 = int_to_ptr.vmem [resolvable:$true] %s653
          %s655 = sshll.u32 %s651, 4
          %s656 = int_to_ptr.hbm [resolvable:$true] %s655
          %658 = dma.vmem_to_hbm [thread:$0]  %s654, 128, %s656, %s636
        $region68: #{tpu_custom_call.1} parent=47 // pred_fallthru
          _
        // Predicated region
        $region69: #{tpu_custom_call.1} parent=47 // pred_check
          %p659 = pneg %p227
        $region70: #{tpu_custom_call.1} parent=47 // pred_check_branch
          %661 = sbr.rel (%p659) target = $region72
        $region71: #{tpu_custom_call.1} parent=47 // pred_region
          %663 = vsyncadd %s641, 0
          %s664 = smul.addr %s31, 8
          %s665 = scalar_lea.hbm %s8, %s664
          %s667 = sshll.u32 %s644, 4
          %s668 = int_to_ptr.vmem [resolvable:$true] %s667
          %s669 = sshll.u32 %s665, 4
          %s670 = int_to_ptr.hbm [resolvable:$true] %s669
          %672 = dma.vmem_to_hbm [thread:$0]  %s668, 128, %s670, %s641
        $region72: #{tpu_custom_call.1} parent=47 // pred_fallthru
          _
      $region48: #{tpu_custom_call.1} parent=5 // pred_fallthru
        _
      %p673 = scmp.le.s32.totalorder 2, %s26
      // Predicated region
      $region73: #{tpu_custom_call.1} parent=5 // pred_check
        %p674 = pneg %p673
      $region74: #{tpu_custom_call.1} parent=5 // pred_check_branch
        %676 = sbr.rel (%p674) target = $region76
      $region75: #{tpu_custom_call.1} parent=5 // pred_region
        %s677 = ssub.s32 %s26, 2
        // Predicated region
        $region77: #{tpu_custom_call.1} parent=75 // pred_check
          %p678 = pneg %p207
        $region78: #{tpu_custom_call.1} parent=75 // pred_check_branch
          %680 = sbr.rel (%p678) target = $region80
        $region79: #{tpu_custom_call.1} parent=75 // pred_region
          %s681 = sand.u32 %s192, 1
          %s682 = scalar_lea.sflag [#allocation4], %s681
          %s683 = sand.u32 %s192, 1
          %s684 = smul.addr %s683, 8
          %s685 = scalar_lea.vmem [#allocation10], %s684
          %687 = dma.done %s682, 128
        $region80: #{tpu_custom_call.1} parent=75 // pred_fallthru
          _
        // Predicated region
        $region81: #{tpu_custom_call.1} parent=75 // pred_check
          %p688 = pneg %p233
        $region82: #{tpu_custom_call.1} parent=75 // pred_check_branch
          %690 = sbr.rel (%p688) target = $region84
        $region83: #{tpu_custom_call.1} parent=75 // pred_region
          %s691 = sand.u32 %s218, 1
          %s692 = scalar_lea.sflag [#allocation12], %s691
          %s693 = sand.u32 %s218, 1
          %s694 = smul.addr %s693, 8
          %s695 = scalar_lea.vmem [#allocation11], %s694
          %697 = dma.done %s692, 128
        $region84: #{tpu_custom_call.1} parent=75 // pred_fallthru
          _
      $region76: #{tpu_custom_call.1} parent=5 // pred_fallthru
        _
    $region6: #{tpu_custom_call.1} parent=1 // loop_footer
      %s30 = sadd.s32 1, %s26
    $region7: #{tpu_custom_call.1} parent=1 // loop_footer_branch
      %25 = sbr.rel target = $region3
    $region8: #{tpu_custom_call.1} parent=1 // loop_exit
      _
    %698 = vsyncpa [#allocation3], 1
    %s699 = scalar_lea.sflag [#allocation3], 1
    %700 = vsyncpa %s699, 1
    %701 = vsyncpa [#allocation6], 1
    %702 = vsyncpa [#allocation9], 1
    %703 = vsyncpa [#allocation4], 1
    %s704 = scalar_lea.sflag [#allocation4], 1
    %705 = vsyncpa %s704, 1
    %706 = vsyncpa [#allocation12], 1
    %s707 = scalar_lea.sflag [#allocation12], 1
    %708 = vsyncpa %s707, 1

</llo_original>
